<compile_context>
chip_gen: v7x
topology: tpu7x:2x2x1
jax: 0.10.0
libtpu: 0.0.40
codegen_flags: <defaults>
</compile_context>

<pallas_src>
import functools

import numpy as np
import jax
import jax.numpy as jnp
from jax import lax
from jax.experimental import pallas as pl
from jax.experimental.pallas import tpu as pltpu


_EPS = 1e-3          # detrex inverse_sigmoid eps
_LANE = 128
_ROW_TILE = 2048     # max slots per grid step in the fused kernel


def _round_up(x, m):
    return ((x + m - 1) // m) * m


def _choose_row_tiling(m):
    """Pad the flattened slot axis and pick the per-grid-step tile width."""
    m_lane = max(_round_up(m, _LANE), _LANE)
    if m_lane < 1024:
        # tiny problem: one grid step; splitting would only add per-step overhead
        return m_lane, m_lane
    # >= 2 "parallel" grid steps so both v7x TensorCores get work; tiles <= _ROW_TILE
    row_tile = min(_ROW_TILE, _round_up(-(-m_lane // 2), 512))
    m_pad = _round_up(m_lane, row_tile)
    return m_pad, row_tile


# --------------------------------------------------------------------------
# Fused kernel: label embedding lookup + contrastive box noise + inverse_sigmoid
#   labels_ref : (1, TM)     int32  (-1 marks empty/padding slots)
#   geom_ref   : (8, TM)     f32    rows [cx, cy, w, h, nx1, ny1, nx2, ny2]
#   table_ref  : (C_pad, D)  f32    nn.Embedding weight, class dim zero-padded
#   label_out  : (TM, D)     f32    label queries (already slot-major)
#   box_out    : (4, TM)     f32    inverse_sigmoid of noised cxcywh (0 if empty)
# --------------------------------------------------------------------------
def _cdn_fused_kernel(box_noise_scale, eps,
                      labels_ref, geom_ref, table_ref,
                      label_out_ref, box_out_ref):
    labels = labels_ref[...]                               # (1, TM) int32
    valid = (labels >= 0).astype(jnp.float32)              # (1, TM)

    # ---- label queries: out[t, :] = weight[label[t], :]  (one-hot MXU matmul)
    # one-hot stays class-major (C_pad, TM) -- a cheap sublane-broadcast compare --
    # and is contracted as a transposed LHS so the result lands directly in
    # (TM, D) layout (no post-kernel transpose needed in the wrapper).
    c_pad = table_ref.shape[0]
    tm = labels.shape[1]
    class_iota = lax.broadcasted_iota(jnp.int32, (c_pad, tm), 0)
    onehot = (labels == class_iota).astype(jnp.float32)    # all-zero column if label < 0
    # NOTE: Mosaic's default f32 matmul path is multi-pass; the reference check
    # below confirms it reproduces the gathered embedding rows at rtol=1e-5.
    label_out_ref[...] = lax.dot_general(
        onehot, table_ref[...],
        dimension_numbers=(((0,), (0,)), ((), ())),
        preferred_element_type=jnp.float32)

    # ---- contrastive box noise, component-major rows (lanes = slots)
    cxcy = geom_ref[0:2, :]                                # (2, TM): cx, cy
    half = geom_ref[2:4, :] * 0.5                          # (2, TM): w/2, h/2
    lo = jnp.clip(cxcy - half + geom_ref[4:6, :] * half * box_noise_scale, 0.0, 1.0)
    hi = jnp.clip(cxcy + half + geom_ref[6:8, :] * half * box_noise_scale, 0.0, 1.0)

    def inv_sigmoid(x):
        x = jnp.clip(x, 0.0, 1.0)
        return jnp.log(jnp.maximum(x, eps) / jnp.maximum(1.0 - x, eps))

    box_out_ref[0:2, :] = inv_sigmoid((lo + hi) * 0.5) * valid   # cx, cy
    box_out_ref[2:4, :] = inv_sigmoid(hi - lo) * valid           # w, h


# --------------------------------------------------------------------------
# CDN attention mask.  1 == "not allowed to attend".  Built once per shape.
# --------------------------------------------------------------------------
def _attn_mask_kernel(noised_query_nums, group_size, out_ref):
    t = out_ref.shape[0]
    r = lax.broadcasted_iota(jnp.int32, (t, t), 0)
    c = lax.broadcasted_iota(jnp.int32, (t, t), 1)

    # matching queries cannot see any denoising query
    match_blocked = jnp.logical_and(r >= noised_query_nums, c < noised_query_nums)

    # denoising queries cannot see denoising queries of another group
    # (f32 floor-div is exact for t < 2**24; group_size is a static python int)
    gs = float(group_size)
    rg = jnp.floor(r.astype(jnp.float32) / gs)
    cg = jnp.floor(c.astype(jnp.float32) / gs)
    cross_group = jnp.logical_and(
        jnp.logical_and(r < noised_query_nums, c < noised_query_nums), rg != cg)

    out_ref[...] = jnp.logical_or(match_blocked, cross_group).astype(jnp.int8)


# --------------------------------------------------------------------------
# Module wrapper
# --------------------------------------------------------------------------
class GenerateCDNQueries:
    def __init__(self, num_queries=300, num_classes=80, label_embed_dim=256,
                 denoising_nums=100, label_noise_prob=0.5, box_noise_scale=1.0,
                 rng=None):
        self.num_queries = num_queries
        self.num_classes = num_classes
        self.label_embed_dim = label_embed_dim
        self.denoising_nums = denoising_nums
        self.label_noise_prob = label_noise_prob
        self.box_noise_scale = box_noise_scale
        if rng is None:
            rng = jax.random.PRNGKey(0)
        # nn.Embedding(num_classes, label_embed_dim): weight ~ N(0, 1)
        self.label_encoder_weight = jax.random.normal(
            rng, (num_classes, label_embed_dim), jnp.float32)
        # class dim zero-padded to a multiple of 128 for the kernel (non-ragged MXU K)
        self.num_classes_padded = _round_up(num_classes, _LANE)
        self.label_encoder_weight_padded = (
            jnp.zeros((self.num_classes_padded, label_embed_dim), jnp.float32)
            .at[:num_classes].set(self.label_encoder_weight))
        self._mask_cache = {}

    # ---------------- cached attention mask (Pallas, int8 -> bool) --------
    def _attn_mask_pallas(self, noised_query_nums, group_size):
        key = (noised_query_nums, group_size, self.num_queries)
        mask = self._mask_cache.get(key)
        if mask is None:
            t = noised_query_nums + self.num_queries
            mask_i8 = pl.pallas_call(
                functools.partial(_attn_mask_kernel, noised_query_nums, group_size),
                out_shape=jax.ShapeDtypeStruct((t, t), jnp.int8),
                out_specs=pl.BlockSpec(memory_space=pltpu.MemorySpace.VMEM),
            )()
            mask = mask_i8.astype(jnp.bool_)
            self._mask_cache[key] = mask
        return mask

    # ---------------- forward ---------------------------------------------
    def forward(self, gt_labels_list, gt_boxes_list, rng, use_pallas=True):
        assert len(gt_labels_list) == len(gt_boxes_list)
        batch_size = len(gt_labels_list)

        denoising_nums = self.denoising_nums * 2
        gt_nums_per_image = [int(x.shape[0]) for x in gt_labels_list]
        max_gt = max(gt_nums_per_image)
        # TODO(synk): bucketing max_gt (e.g. round up to a multiple of 8) would make
        # all shapes step-invariant and avoid recompiles, but changes the output
        # shapes vs the PyTorch reference, so it is not applied here.
        denoising_groups = max(denoising_nums // max_gt, 1)
        self.denoising_groups = denoising_groups
        reps = denoising_groups * 2                     # positive + negative per group

        gt_labels = jnp.concatenate(gt_labels_list).astype(jnp.int32)     # (total_gt,)
        gt_boxes = jnp.concatenate(gt_boxes_list).astype(jnp.float32)     # (total_gt, 4)
        total_gt = int(gt_labels.shape[0])

        labels_rep = jnp.tile(gt_labels, reps)                            # (N,)
        boxes_rep = jnp.tile(gt_boxes, (reps, 1))                         # (N, 4)
        n_total = total_gt * reps

        # ----- randoms (torch.rand / torch.randint equivalents) -----------
        k1, k2, k3, k4 = jax.random.split(rng, 4)
        p_rand = jax.random.uniform(k1, (n_total,), jnp.float32)
        rand_labels = jax.random.randint(k2, (n_total,), 0, self.num_classes, jnp.int32)
        rand_sign = (jax.random.randint(k3, (n_total, 4), 0, 2).astype(jnp.float32)
                     * 2.0 - 1.0)
        rand_part = jax.random.uniform(k4, (n_total, 4), jnp.float32)

        # negative rows (flat layout [g0 pos | g0 neg | g1 pos | g1 neg | ...],
        # matching detrex's positive_idx / negative_idx arithmetic)
        neg_mask = (((np.arange(n_total) // total_gt) % 2) == 1)
        neg_mask = jnp.asarray(neg_mask.astype(np.float32).reshape(n_total, 1))

        # compact elementwise pre-processing (cheap fused XLA; shrinks kernel inputs)
        noise_prob = self.label_noise_prob * 0.5
        noised_labels = jnp.where(p_rand < noise_prob, rand_labels, labels_rep)  # (N,)
        part_final = (rand_part + neg_mask) * rand_sign                          # (N, 4)

        # ----- scatter bookkeeping (index arithmetic glue, as in PyTorch) --
        q = max_gt * denoising_groups * 2              # noised_query_nums
        m = batch_size * q
        d = self.label_embed_dim
        group_size = 2 * max_gt
        tgt_size = q + self.num_queries

        batch_idx_per_instance = np.repeat(np.arange(batch_size), gt_nums_per_image)
        batch_idx_per_group = np.tile(batch_idx_per_instance, reps)             # (N,)
        valid_index = np.concatenate([np.arange(n) for n in gt_nums_per_image])
        valid_index_per_group = np.concatenate(
            [valid_index + max_gt * i for i in range(reps)])                     # (N,)
        flat_slot = (batch_idx_per_group * q + valid_index_per_group).astype(np.int32)

        if use_pallas:
            m_pad, row_tile = _choose_row_tiling(m)
            n_steps = m_pad // row_tile

            labels_t = (jnp.full((m_pad,), -1, jnp.int32)
                        .at[flat_slot].set(noised_labels)
                        .reshape(1, m_pad))
            # merged geometry tile: rows [cx, cy, w, h, nx1, ny1, nx2, ny2]
            geom_rows = jnp.concatenate([boxes_rep, part_final], axis=1)     # (N, 8)
            geom_t = (jnp.zeros((8, m_pad), jnp.float32)
                      .at[:, flat_slot].set(geom_rows.T))

            c_pad = self.num_classes_padded
            # explicit scoped-VMEM budget (v5e default is only 16 MiB)
            vmem_est = 4 * (2 * row_tile * d      # label_out (double-buffered)
                            + 2 * 4 * row_tile    # box_out
                            + 2 * 9 * row_tile    # labels + geom inputs
                            + 2 * c_pad * d       # table (grid-invariant)
                            + c_pad * row_tile)   # in-kernel one-hot temporary
            vmem_limit = int(min(max(vmem_est + (8 << 20), 32 << 20), 64 << 20))

            # TODO(synk): for open-vocabulary class counts (C in the thousands) add an
            # inner "arbitrary" class-tile grid axis with a VMEM accumulator, and mark
            # the grid-invariant table BlockSpec pipeline_mode=pl.Buffered(1) to drop
            # its redundant second buffer.
            kernel = functools.partial(_cdn_fused_kernel, self.box_noise_scale, _EPS)
            label_out, box_out_t = pl.pallas_call(
                kernel,
                out_shape=(jax.ShapeDtypeStruct((m_pad, d), jnp.float32),
                           jax.ShapeDtypeStruct((4, m_pad), jnp.float32)),
                grid=(n_steps,),
                in_specs=[
                    pl.BlockSpec((1, row_tile), lambda i: (0, i)),
                    pl.BlockSpec((8, row_tile), lambda i: (0, i)),
                    pl.BlockSpec((c_pad, d), lambda i: (0, 0)),
                ],
                out_specs=(
                    pl.BlockSpec((row_tile, d), lambda i: (i, 0)),
                    pl.BlockSpec((4, row_tile), lambda i: (0, i)),
                ),
                compiler_params=pltpu.CompilerParams(
                    dimension_semantics=("parallel",),
                    vmem_limit_bytes=vmem_limit),
            )(labels_t, geom_t, self.label_encoder_weight_padded)

            noised_label_queries = label_out[:m].reshape(batch_size, q, d)
            noised_box_queries = box_out_t[:, :m].T.reshape(batch_size, q, 4)
            attn_mask = self._attn_mask_pallas(q, group_size)

        else:
            # ----- pure-JAX / NumPy reference (same randoms, same layout) ---
            label_rows = self.label_encoder_weight[noised_labels]           # (N, D)
            noised_label_queries = (jnp.zeros((m, d), jnp.float32)
                                    .at[flat_slot].set(label_rows)
                                    .reshape(batch_size, q, d))

            hw = boxes_rep[:, 2:3] * 0.5
            hh = boxes_rep[:, 3:4] * 0.5
            diff = jnp.concatenate([hw, hh, hw, hh], axis=-1)
            xyxy = jnp.concatenate(
                [boxes_rep[:, 0:1] - hw, boxes_rep[:, 1:2] - hh,
                 boxes_rep[:, 0:1] + hw, boxes_rep[:, 1:2] + hh], axis=-1)
            xyxy = jnp.clip(xyxy + part_final * diff * self.box_noise_scale, 0.0, 1.0)
            cxcywh = jnp.concatenate(
                [(xyxy[:, 0:1] + xyxy[:, 2:3]) * 0.5,
                 (xyxy[:, 1:2] + xyxy[:, 3:4]) * 0.5,
                 xyxy[:, 2:3] - xyxy[:, 0:1],
                 xyxy[:, 3:4] - xyxy[:, 1:2]], axis=-1)
            x = jnp.clip(cxcywh, 0.0, 1.0)
            noised_boxes = jnp.log(jnp.maximum(x, _EPS) / jnp.maximum(1.0 - x, _EPS))
            noised_box_queries = (jnp.zeros((m, 4), jnp.float32)
                                  .at[flat_slot].set(noised_boxes)
                                  .reshape(batch_size, q, 4))

            # torch-style loop reference for the mask
            attn = np.zeros((tgt_size, tgt_size), dtype=bool)
            attn[q:, :q] = True
            gs = group_size
            for i in range(denoising_groups):
                if i == 0:
                    attn[gs * i:gs * (i + 1), gs * (i + 1):q] = True
                if i == denoising_groups - 1:
                    attn[gs * i:gs * (i + 1), :gs * i] = True
                else:
                    attn[gs * i:gs * (i + 1), gs * (i + 1):q] = True
                    attn[gs * i:gs * (i + 1), :gs * i] = True
            attn_mask = jnp.asarray(attn)

        return (noised_label_queries, noised_box_queries, attn_mask,
                denoising_groups, max_gt)


if __name__ == "__main__":
    key = jax.random.PRNGKey(0)
    k_init, k_data, k_fwd = jax.random.split(key, 3)

    num_classes = 8
    embed_dim = 128   # lane-dense label-query store (module default is 256)
    module = GenerateCDNQueries(num_queries=16, num_classes=num_classes,
                                label_embed_dim=embed_dim, denoising_nums=4,
                                label_noise_prob=0.5, box_noise_scale=1.0,
                                rng=k_init)

    # small ragged ground-truth lists: image0 has 3 boxes, image1 has 2
    gt_nums = [3, 2]
    gt_labels_list, gt_boxes_list = [], []
    for i, n in enumerate(gt_nums):
        kl, kc, kw = jax.random.split(jax.random.fold_in(k_data, i), 3)
        gt_labels_list.append(jax.random.randint(kl, (n,), 0, num_classes, jnp.int32))
        cxcy = jax.random.uniform(kc, (n, 2), jnp.float32, 0.2, 0.8)
        wh = jax.random.uniform(kw, (n, 2), jnp.float32, 0.1, 0.3)
        gt_boxes_list.append(jnp.concatenate([cxcy, wh], axis=1))

    # Pallas forward
    lq, bq, am, groups, max_gt = module.forward(gt_labels_list, gt_boxes_list,
                                                k_fwd, use_pallas=True)
    jax.block_until_ready((lq, bq, am))

    # pure-JAX reference (same randoms, same key)
    lq_r, bq_r, am_r, groups_r, max_gt_r = module.forward(
        gt_labels_list, gt_boxes_list, k_fwd, use_pallas=False)

    np.testing.assert_allclose(np.asarray(lq), np.asarray(lq_r), rtol=1e-5, atol=1e-5)
    np.testing.assert_allclose(np.asarray(bq), np.asarray(bq_r), rtol=1e-4, atol=1e-5)
    assert np.array_equal(np.asarray(am), np.asarray(am_r))
    assert groups == groups_r and max_gt == max_gt_r
    assert lq.shape == (2, max_gt * groups * 2, embed_dim)
    assert bq.shape == (2, max_gt * groups * 2, 4)
    assert am.shape == (max_gt * groups * 2 + 16,) * 2 and am.dtype == jnp.bool_

    print("KERNEL_OK")
</pallas_src>

<mosaic_0001>
module attributes {stable_mosaic.version = 11 : i64} {
  func.func @_cdn_fused_kernel(%arg0: i32, %arg1: memref<1x128xi32, #tpu.memory_space<vmem>>, %arg2: memref<8x128xf32, #tpu.memory_space<vmem>>, %arg3: memref<128x128xf32, #tpu.memory_space<vmem>>, %arg4: memref<128x128xf32, #tpu.memory_space<vmem>>, %arg5: memref<4x128xf32, #tpu.memory_space<vmem>>) attributes {dimension_semantics = [#tpu.dimension_semantics<parallel>], iteration_bounds = array<i64: 1>, scalar_prefetch = 0 : i64, scratch_operands = 0 : i64, tpu.core_type = #tpu.core_type<tc>, window_params = [{transform_indices = @transform_0, window_bounds = array<i64: 1, 128>}, {transform_indices = @transform_1, window_bounds = array<i64: 8, 128>}, {pipeline_mode = #tpu.pipeline_mode<synchronous>, transform_indices = @transform_2, window_bounds = array<i64: 128, 128>}, {transform_indices = @transform_3, window_bounds = array<i64: 128, 128>}, {transform_indices = @transform_4, window_bounds = array<i64: 4, 128>}]} {
    %c0 = arith.constant 0 : index
    %c0_0 = arith.constant 0 : index
    %0 = vector.load %arg1[%c0, %c0_0] : memref<1x128xi32, #tpu.memory_space<vmem>>, vector<1x128xi32>
    %c0_i32 = arith.constant 0 : i32
    %1 = vector.broadcast %c0_i32 : i32 to vector<1x128xi32>
    %2 = arith.cmpi sge, %0, %1 : vector<1x128xi32>
    %3 = arith.extui %2 : vector<1x128xi1> to vector<1x128xi32>
    %4 = arith.sitofp %3 : vector<1x128xi32> to vector<1x128xf32>
    %5 = tpu.iota {dimensions = array<i32: 0>} : vector<128x128xi32>
    %6 = vector.broadcast %0 : vector<1x128xi32> to vector<128x128xi32>
    %7 = arith.cmpi eq, %6, %5 : vector<128x128xi32>
    %8 = arith.extui %7 : vector<128x128xi1> to vector<128x128xi32>
    %9 = arith.sitofp %8 : vector<128x128xi32> to vector<128x128xf32>
    %c0_1 = arith.constant 0 : index
    %c0_2 = arith.constant 0 : index
    %10 = vector.load %arg3[%c0_1, %c0_2] : memref<128x128xf32, #tpu.memory_space<vmem>>, vector<128x128xf32>
    %cst = arith.constant dense<0.000000e+00> : vector<128x128xf32>
    %11 = tpu.matmul %9, %10, %cst {dimension_numbers = #tpu.dot_dimension_numbers<[0], [0], [1], [1], [0, 1, 1, 1], [], []>} : vector<128x128xf32>, vector<128x128xf32>, vector<128x128xf32> -> vector<128x128xf32>
    %c0_3 = arith.constant 0 : index
    %c0_4 = arith.constant 0 : index
    %12 = vector.load %arg4[%c0_3, %c0_4] : memref<128x128xf32, #tpu.memory_space<vmem>>, vector<128x128xf32>
    tpu.vector_store %arg4[%c0_3, %c0_4], %11 {strides = array<i32>} : memref<128x128xf32, #tpu.memory_space<vmem>>, vector<128x128xf32>,
    %c0_5 = arith.constant 0 : index
    %c0_6 = arith.constant 0 : index
    %13 = vector.load %arg2[%c0_5, %c0_6] : memref<8x128xf32, #tpu.memory_space<vmem>>, vector<2x128xf32>
    %c2 = arith.constant 2 : index
    %c0_7 = arith.constant 0 : index
    %14 = vector.load %arg2[%c2, %c0_7] : memref<8x128xf32, #tpu.memory_space<vmem>>, vector<2x128xf32>
    %cst_8 = arith.constant 5.000000e-01 : f32
    %15 = vector.broadcast %cst_8 : f32 to vector<2x128xf32>
    %16 = arith.mulf %14, %15 : vector<2x128xf32>
    %17 = arith.subf %13, %16 : vector<2x128xf32>
    %c4 = arith.constant 4 : index
    %c0_9 = arith.constant 0 : index
    %18 = vector.load %arg2[%c4, %c0_9] : memref<8x128xf32, #tpu.memory_space<vmem>>, vector<2x128xf32>
    %19 = arith.mulf %18, %16 : vector<2x128xf32>
    %cst_10 = arith.constant 1.000000e+00 : f32
    %20 = vector.broadcast %cst_10 : f32 to vector<2x128xf32>
    %21 = arith.mulf %19, %20 : vector<2x128xf32>
    %22 = arith.addf %17, %21 : vector<2x128xf32>
    %cst_11 = arith.constant 0.000000e+00 : f32
    %cst_12 = arith.constant 1.000000e+00 : f32
    %23 = vector.broadcast %cst_11 : f32 to vector<2x128xf32>
    %24 = arith.maximumf %23, %22 : vector<2x128xf32>
    %25 = vector.broadcast %cst_12 : f32 to vector<2x128xf32>
    %26 = arith.minimumf %25, %24 : vector<2x128xf32>
    %27 = arith.addf %13, %16 : vector<2x128xf32>
    %c6 = arith.constant 6 : index
    %c0_13 = arith.constant 0 : index
    %28 = vector.load %arg2[%c6, %c0_13] : memref<8x128xf32, #tpu.memory_space<vmem>>, vector<2x128xf32>
    %29 = arith.mulf %28, %16 : vector<2x128xf32>
    %cst_14 = arith.constant 1.000000e+00 : f32
    %30 = vector.broadcast %cst_14 : f32 to vector<2x128xf32>
    %31 = arith.mulf %29, %30 : vector<2x128xf32>
    %32 = arith.addf %27, %31 : vector<2x128xf32>
    %cst_15 = arith.constant 0.000000e+00 : f32
    %cst_16 = arith.constant 1.000000e+00 : f32
    %33 = vector.broadcast %cst_15 : f32 to vector<2x128xf32>
    %34 = arith.maximumf %33, %32 : vector<2x128xf32>
    %35 = vector.broadcast %cst_16 : f32 to vector<2x128xf32>
    %36 = arith.minimumf %35, %34 : vector<2x128xf32>
    %37 = arith.addf %26, %36 : vector<2x128xf32>
    %cst_17 = arith.constant 5.000000e-01 : f32
    %38 = vector.broadcast %cst_17 : f32 to vector<2x128xf32>
    %39 = arith.mulf %37, %38 : vector<2x128xf32>
    %cst_18 = arith.constant 0.000000e+00 : f32
    %cst_19 = arith.constant 1.000000e+00 : f32
    %40 = vector.broadcast %cst_18 : f32 to vector<2x128xf32>
    %41 = arith.maximumf %40, %39 : vector<2x128xf32>
    %42 = vector.broadcast %cst_19 : f32 to vector<2x128xf32>
    %43 = arith.minimumf %42, %41 : vector<2x128xf32>
    %cst_20 = arith.constant 1.000000e-03 : f32
    %44 = vector.broadcast %cst_20 : f32 to vector<2x128xf32>
    %45 = arith.maximumf %43, %44 : vector<2x128xf32>
    %cst_21 = arith.constant 1.000000e+00 : f32
    %46 = vector.broadcast %cst_21 : f32 to vector<2x128xf32>
    %47 = arith.subf %46, %43 : vector<2x128xf32>
    %cst_22 = arith.constant 1.000000e-03 : f32
    %48 = vector.broadcast %cst_22 : f32 to vector<2x128xf32>
    %49 = arith.maximumf %47, %48 : vector<2x128xf32>
    %50 = arith.divf %45, %49 : vector<2x128xf32>
    %51 = math.log %50 : vector<2x128xf32>
    %52 = vector.broadcast %4 : vector<1x128xf32> to vector<2x128xf32>
    %53 = arith.mulf %51, %52 : vector<2x128xf32>
    %c0_23 = arith.constant 0 : index
    %c0_24 = arith.constant 0 : index
    %54 = vector.load %arg5[%c0_23, %c0_24] : memref<4x128xf32, #tpu.memory_space<vmem>>, vector<2x128xf32>
    tpu.vector_store %arg5[%c0_23, %c0_24], %53 {strides = array<i32>} : memref<4x128xf32, #tpu.memory_space<vmem>>, vector<2x128xf32>,
    %55 = arith.subf %36, %26 : vector<2x128xf32>
    %cst_25 = arith.constant 0.000000e+00 : f32
    %cst_26 = arith.constant 1.000000e+00 : f32
    %56 = vector.broadcast %cst_25 : f32 to vector<2x128xf32>
    %57 = arith.maximumf %56, %55 : vector<2x128xf32>
    %58 = vector.broadcast %cst_26 : f32 to vector<2x128xf32>
    %59 = arith.minimumf %58, %57 : vector<2x128xf32>
    %cst_27 = arith.constant 1.000000e-03 : f32
    %60 = vector.broadcast %cst_27 : f32 to vector<2x128xf32>
    %61 = arith.maximumf %59, %60 : vector<2x128xf32>
    %cst_28 = arith.constant 1.000000e+00 : f32
    %62 = vector.broadcast %cst_28 : f32 to vector<2x128xf32>
    %63 = arith.subf %62, %59 : vector<2x128xf32>
    %cst_29 = arith.constant 1.000000e-03 : f32
    %64 = vector.broadcast %cst_29 : f32 to vector<2x128xf32>
    %65 = arith.maximumf %63, %64 : vector<2x128xf32>
    %66 = arith.divf %61, %65 : vector<2x128xf32>
    %67 = math.log %66 : vector<2x128xf32>
    %68 = vector.broadcast %4 : vector<1x128xf32> to vector<2x128xf32>
    %69 = arith.mulf %67, %68 : vector<2x128xf32>
    %c2_30 = arith.constant 2 : index
    %c0_31 = arith.constant 0 : index
    %70 = vector.load %arg5[%c2_30, %c0_31] : memref<4x128xf32, #tpu.memory_space<vmem>>, vector<2x128xf32>
    tpu.vector_store %arg5[%c2_30, %c0_31], %69 {strides = array<i32>} : memref<4x128xf32, #tpu.memory_space<vmem>>, vector<2x128xf32>,
    return
  }
  func.func @transform_0(%arg0: i32) -> (i32, i32) {
    %c0_i32 = arith.constant 0 : i32
    %c0_i32_0 = arith.constant 0 : i32
    return %c0_i32, %arg0 : i32, i32
  }
  func.func @transform_1(%arg0: i32) -> (i32, i32) {
    %c0_i32 = arith.constant 0 : i32
    %c0_i32_0 = arith.constant 0 : i32
    return %c0_i32, %arg0 : i32, i32
  }
  func.func @transform_2(%arg0: i32) -> (i32, i32) {
    %c0_i32 = arith.constant 0 : i32
    %c0_i32_0 = arith.constant 0 : i32
    %c0_i32_1 = arith.constant 0 : i32
    return %c0_i32, %c0_i32_0 : i32, i32
  }
  func.func @transform_3(%arg0: i32) -> (i32, i32) {
    %c0_i32 = arith.constant 0 : i32
    %c0_i32_0 = arith.constant 0 : i32
    return %arg0, %c0_i32 : i32, i32
  }
  func.func @transform_4(%arg0: i32) -> (i32, i32) {
    %c0_i32 = arith.constant 0 : i32
    %c0_i32_0 = arith.constant 0 : i32
    return %c0_i32, %arg0 : i32, i32
  }
}

</mosaic_0001>

<llo_original>
// kernel: tpu_custom_call.1
$region0: #{tpu_custom_call.1}
  #allocation0 [shape = 'u32[]', space=smem, size = 0x4, offset = 0x4, fixed_abs, tag = 'smem constant byte address 0x4 - core index']
  #allocation1 [shape = 'u32[144,128]{1,0:T(1,128)}', space=vmem, size = 0x12000, scoped, tag = 'internal scratch']
  %s0 = inlined_call_operand.hbm [shape: s32[1,128], index: 0, kind: input, shape index: {}]
  %s1 = inlined_call_operand.hbm [shape: f32[8,128], index: 1, kind: input, shape index: {}]
  %s2 = inlined_call_operand.hbm [shape: f32[128,128], index: 2, kind: input, shape index: {}]
  %s3 = inlined_call_operand.hbm [shape: f32[128,128], index: 3, kind: output, shape index: {0}]
  %s4 = inlined_call_operand.hbm [shape: f32[4,128], index: 4, kind: output, shape index: {1}]
  %5 = xla_tuple %s3, %s4
  %s6 = sld [smem:[#allocation0]]
  $region42: #{tpu_custom_call.1} parent=0
    _
  %s8 = ssub.s32 1, %s6
  %s9 = scalar_select 0, %s8, %s6
  $region1: #{tpu_custom_call.1} parent=0
    #allocation2 [shape = 'u8[512]{0}', space=vmem, size = 0x400, scoped, tag = 'input window, operand 0, single buffered']
    #allocation3 [shape = 's32[1]{0}', space=sflag, size = 0x4, scoped, tag = 'scoped memory for tpu_custom_call.1']
    #allocation4 [shape = 's32[1]{0}', space=sflag, size = 0x4, scoped, tag = 'scoped memory for tpu_custom_call.1']
    #allocation5 [shape = 'u8[4096]{0}', space=vmem, size = 0x1000, scoped, tag = 'input window, operand 1, single buffered']
    #allocation6 [shape = 's32[1]{0}', space=sflag, size = 0x4, scoped, tag = 'scoped memory for tpu_custom_call.1']
    #allocation7 [shape = 'u8[65536]{0}', space=vmem, size = 0x10000, scoped, tag = 'input window, operand 2, single buffered']
    #allocation8 [shape = 'u8[65536]{0}', space=vmem, size = 0x10000, scoped, tag = 'output window, operand 0, single buffered']
    #allocation9 [shape = 'u8[2048]{0}', space=vmem, size = 0x800, scoped, tag = 'output window, operand 1, single buffered']
    #allocation10 [shape = 's32[1]{0}', space=sflag, size = 0x4, scoped, tag = 'scoped memory for tpu_custom_call.1']
    %10 = vsyncpa [#allocation3], 0
    %11 = vsyncpa [#allocation6], 0
    %12 = vsyncpa [#allocation4], 0
    %13 = vsyncpa [#allocation10], 0
    // Predicated region
    $region2: #{tpu_custom_call.1} parent=1 // pred_check
      _
    $region3: #{tpu_custom_call.1} parent=1 // pred_check_branch
      %15 = sbr.rel (0) target = $region5
    $region4: #{tpu_custom_call.1} parent=1 // pred_region
      %s17 = ssub.s32 16, 16
      %18 = vsyncadd [#allocation3], %s17
      %s20 = sshll.u32 [#allocation2], 4
      %s21 = int_to_ptr.vmem [resolvable:$true] %s20
      %23 = dma.hbm_to_vmem [thread:$0]  %s0, 16, %s21, [#allocation3]
    $region5: #{tpu_custom_call.1} parent=1 // pred_fallthru
      _
    // Predicated region
    $region6: #{tpu_custom_call.1} parent=1 // pred_check
      _
    $region7: #{tpu_custom_call.1} parent=1 // pred_check_branch
      %25 = sbr.rel (0) target = $region9
    $region8: #{tpu_custom_call.1} parent=1 // pred_region
      %s27 = ssub.s32 128, 128
      %28 = vsyncadd [#allocation6], %s27
      %s30 = sshll.u32 [#allocation5], 4
      %s31 = int_to_ptr.vmem [resolvable:$true] %s30
      %33 = dma.hbm_to_vmem [thread:$0]  %s1, 128, %s31, [#allocation6]
    $region9: #{tpu_custom_call.1} parent=1 // pred_fallthru
      _
    // Predicated region
    $region10: #{tpu_custom_call.1} parent=1 // pred_check
      _
    $region11: #{tpu_custom_call.1} parent=1 // pred_check_branch
      %35 = sbr.rel (0) target = $region13
    $region12: #{tpu_custom_call.1} parent=1 // pred_region
      %s37 = ssub.s32 2048, 2048
      %38 = vsyncadd [#allocation6], %s37
      %s39 = sshll.u32 [#allocation7], 4
      %s40 = int_to_ptr.vmem [resolvable:$true] %s39
      %45 = dma.hbm_to_vmem [thread:$0]  %s2, 2048, %s40, [#allocation6], 128, 128, 8
    $region13: #{tpu_custom_call.1} parent=1 // pred_fallthru
      _
    // Predicated region
    $region14: #{tpu_custom_call.1} parent=1 // pred_check
      _
    $region15: #{tpu_custom_call.1} parent=1 // pred_check_branch
      %47 = sbr.rel (0) target = $region17
    $region16: #{tpu_custom_call.1} parent=1 // pred_region
      %48 = dma.done [#allocation3], 16
    $region17: #{tpu_custom_call.1} parent=1 // pred_fallthru
      _
    // Predicated region
    $region18: #{tpu_custom_call.1} parent=1 // pred_check
      _
    $region19: #{tpu_custom_call.1} parent=1 // pred_check_branch
      %50 = sbr.rel (0) target = $region21
    $region20: #{tpu_custom_call.1} parent=1 // pred_region
      %51 = dma.done [#allocation6], 128
    $region21: #{tpu_custom_call.1} parent=1 // pred_fallthru
      _
    // Predicated region
    $region22: #{tpu_custom_call.1} parent=1 // pred_check
      _
    $region23: #{tpu_custom_call.1} parent=1 // pred_check_branch
      %53 = sbr.rel (0) target = $region25
    $region24: #{tpu_custom_call.1} parent=1 // pred_region
      %54 = dma.done [#allocation6], 2048
    $region25: #{tpu_custom_call.1} parent=1 // pred_fallthru
      _
    %v55 = vld [vmem:[#allocation2] sm:$0x1]
    %vm56 = vcmp.ge.s32.totalorder %v55, 0
    %v57 = vsel %vm56, 1, 0
    %v58 = vcvt.s32.f32 %v57
    %v59 = vlaneseq
    %v60 = vshrl.u32 %v59, 7
    %v61 = vadd.s32 %v60, 8
    %v62 = vadd.s32 %v60, 16
    %v63 = vadd.s32 %v60, 24
    %v64 = vadd.s32 %v60, 32
    %v65 = vadd.s32 %v60, 40
    %v66 = vadd.s32 %v60, 48
    %v67 = vadd.s32 %v60, 56
    %v68 = vadd.s32 %v60, 64
    %v69 = vadd.s32 %v60, 72
    %v70 = vadd.s32 %v60, 80
    %v71 = vadd.s32 %v60, 88
    %v72 = vadd.s32 %v60, 96
    %v73 = vadd.s32 %v60, 104
    %v74 = vadd.s32 %v60, 112
    %v75 = vadd.s32 %v60, 120
    %v76 = vlaneseq
    %v77 = vshrl.u32 %v76, 7
    %v78 = vsub.s32 0, %v77
    %v79 = vrot.slane %v55, %v78
    %vm80 = vcmp.eq.s32.totalorder %v79, %v60
    %vm81 = vcmp.eq.s32.totalorder %v79, %v61
    %vm82 = vcmp.eq.s32.totalorder %v79, %v62
    %vm83 = vcmp.eq.s32.totalorder %v79, %v63
    %vm84 = vcmp.eq.s32.totalorder %v79, %v64
    %vm85 = vcmp.eq.s32.totalorder %v79, %v65
    %vm86 = vcmp.eq.s32.totalorder %v79, %v66
    %vm87 = vcmp.eq.s32.totalorder %v79, %v67
    %vm88 = vcmp.eq.s32.totalorder %v79, %v68
    %vm89 = vcmp.eq.s32.totalorder %v79, %v69
    %vm90 = vcmp.eq.s32.totalorder %v79, %v70
    %vm91 = vcmp.eq.s32.totalorder %v79, %v71
    %vm92 = vcmp.eq.s32.totalorder %v79, %v72
    %vm93 = vcmp.eq.s32.totalorder %v79, %v73
    %vm94 = vcmp.eq.s32.totalorder %v79, %v74
    %vm95 = vcmp.eq.s32.totalorder %v79, %v75
    %v96 = vsel %vm80, 1, 0
    %v97 = vsel %vm81, 1, 0
    %v98 = vsel %vm82, 1, 0
    %v99 = vsel %vm83, 1, 0
    %v100 = vsel %vm84, 1, 0
    %v101 = vsel %vm85, 1, 0
    %v102 = vsel %vm86, 1, 0
    %v103 = vsel %vm87, 1, 0
    %v104 = vsel %vm88, 1, 0
    %v105 = vsel %vm89, 1, 0
    %v106 = vsel %vm90, 1, 0
    %v107 = vsel %vm91, 1, 0
    %v108 = vsel %vm92, 1, 0
    %v109 = vsel %vm93, 1, 0
    %v110 = vsel %vm94, 1, 0
    %v111 = vsel %vm95, 1, 0
    %v112 = vcvt.s32.f32 %v96
    %v113 = vcvt.s32.f32 %v97
    %v114 = vcvt.s32.f32 %v98
    %v115 = vcvt.s32.f32 %v99
    %v116 = vcvt.s32.f32 %v100
    %v117 = vcvt.s32.f32 %v101
    %v118 = vcvt.s32.f32 %v102
    %v119 = vcvt.s32.f32 %v103
    %v120 = vcvt.s32.f32 %v104
    %v121 = vcvt.s32.f32 %v105
    %v122 = vcvt.s32.f32 %v106
    %v123 = vcvt.s32.f32 %v107
    %v124 = vcvt.s32.f32 %v108
    %v125 = vcvt.s32.f32 %v109
    %v126 = vcvt.s32.f32 %v110
    %v127 = vcvt.s32.f32 %v111
    %v128 = vld [vmem:[#allocation7] sm:$0xff]
    %v129 = vld [vmem:[#allocation7 + $0x8] sm:$0xff]
    %v130 = vld [vmem:[#allocation7 + $0x10] sm:$0xff]
    %v131 = vld [vmem:[#allocation7 + $0x18] sm:$0xff]
    %v132 = vld [vmem:[#allocation7 + $0x20] sm:$0xff]
    %v133 = vld [vmem:[#allocation7 + $0x28] sm:$0xff]
    %v134 = vld [vmem:[#allocation7 + $0x30] sm:$0xff]
    %v135 = vld [vmem:[#allocation7 + $0x38] sm:$0xff]
    %v136 = vld [vmem:[#allocation7 + $0x40] sm:$0xff]
    %v137 = vld [vmem:[#allocation7 + $0x48] sm:$0xff]
    %v138 = vld [vmem:[#allocation7 + $0x50] sm:$0xff]
    %v139 = vld [vmem:[#allocation7 + $0x58] sm:$0xff]
    %v140 = vld [vmem:[#allocation7 + $0x60] sm:$0xff]
    %v141 = vld [vmem:[#allocation7 + $0x68] sm:$0xff]
    %v142 = vld [vmem:[#allocation7 + $0x70] sm:$0xff]
    %v143 = vld [vmem:[#allocation7 + $0x78] sm:$0xff]
    %144 = vxpose.xlu0.b32.start [1/16] %v112, 128
    %145 = vxpose.xlu0.b32.cont [2/16] %v113, 128
    %146 = vxpose.xlu0.b32.cont [3/16] %v114, 128
    %147 = vxpose.xlu0.b32.cont [4/16] %v115, 128
    %148 = vxpose.xlu0.b32.cont [5/16] %v116, 128
    %149 = vxpose.xlu0.b32.cont [6/16] %v117, 128
    %150 = vxpose.xlu0.b32.cont [7/16] %v118, 128
    %151 = vxpose.xlu0.b32.cont [8/16] %v119, 128
    %152 = vxpose.xlu0.b32.cont [9/16] %v120, 128
    %153 = vxpose.xlu0.b32.cont [10/16] %v121, 128
    %154 = vxpose.xlu0.b32.cont [11/16] %v122, 128
    %155 = vxpose.xlu0.b32.cont [12/16] %v123, 128
    %156 = vxpose.xlu0.b32.cont [13/16] %v124, 128
    %157 = vxpose.xlu0.b32.cont [14/16] %v125, 128
    %158 = vxpose.xlu0.b32.cont [15/16] %v126, 128
    %159 = vxpose.xlu0.b32.end [16/16] %v127, 128
    %v160 = vpop.trf.xlu0
    %v161 = vpop.trf.xlu0
    %v162 = vpop.trf.xlu0
    %v163 = vpop.trf.xlu0
    %v164 = vpop.trf.xlu0
    %v165 = vpop.trf.xlu0
    %v166 = vpop.trf.xlu0
    %v167 = vpop.trf.xlu0
    %v168 = vpop.trf.xlu0
    %v169 = vpop.trf.xlu0
    %v170 = vpop.trf.xlu0
    %v171 = vpop.trf.xlu0
    %v172 = vpop.trf.xlu0
    %v173 = vpop.trf.xlu0
    %v174 = vpop.trf.xlu0
    %v175 = vpop.trf.xlu0
    %176 = vmatprep.subr.mxu0 0.0
    %177 = vmatpush1.msra.mxu0 %v128
    %178 = vmatprep.subr.mxu0 0.0
    %179 = vmatpush1.msra.mxu0 %v129
    %180 = vmatprep.subr.mxu0 0.0
    %181 = vmatpush1.msra.mxu0 %v130
    %182 = vmatprep.subr.mxu0 0.0
    %183 = vmatpush1.msra.mxu0 %v131
    %184 = vmatprep.subr.mxu0 0.0
    %185 = vmatpush1.msra.mxu0 %v132
    %186 = vmatprep.subr.mxu0 0.0
    %187 = vmatpush1.msra.mxu0 %v133
    %188 = vmatprep.subr.mxu0 0.0
    %189 = vmatpush1.msra.mxu0 %v134
    %190 = vmatprep.subr.mxu0 0.0
    %191 = vmatpush1.msra.mxu0 %v135
    %192 = vmatprep.subr.mxu0 0.0
    %193 = vmatpush1.msra.mxu0 %v136
    %194 = vmatprep.subr.mxu0 0.0
    %195 = vmatpush1.msra.mxu0 %v137
    %196 = vmatprep.subr.mxu0 0.0
    %197 = vmatpush1.msra.mxu0 %v138
    %198 = vmatprep.subr.mxu0 0.0
    %199 = vmatpush1.msra.mxu0 %v139
    %200 = vmatprep.subr.mxu0 0.0
    %201 = vmatpush1.msra.mxu0 %v140
    %202 = vmatprep.subr.mxu0 0.0
    %203 = vmatpush1.msra.mxu0 %v141
    %204 = vmatprep.subr.mxu0 0.0
    %205 = vmatpush1.msra.mxu0 %v142
    %206 = vmatprep.subr.mxu0 0.0
    %207 = vmatpush1.msra.mxu0 %v143
    %208 = vmatprep.subr.mxu0 0.0
    %209 = vmatpush1.msra.mxu0 0.0
    %210 = vmatprep.subr.mxu0 0.0
    %211 = vmatpush1.msra.mxu0 0.0
    %212 = vmatprep.subr.mxu0 0.0
    %213 = vmatpush1.msra.mxu0 0.0
    %214 = vmatprep.subr.mxu0 0.0
    %215 = vmatpush1.msra.mxu0 0.0
    %216 = vmatprep.subr.mxu0 0.0
    %217 = vmatpush1.msra.mxu0 0.0
    %218 = vmatprep.subr.mxu0 0.0
    %219 = vmatpush1.msra.mxu0 0.0
    %220 = vmatprep.subr.mxu0 0.0
    %221 = vmatpush1.msra.mxu0 0.0
    %222 = vmatprep.subr.mxu0 0.0
    %223 = vmatpush1.msra.mxu0 0.0
    %224 = vmatprep.subr.mxu0 0.0
    %225 = vmatpush1.msra.mxu0 0.0
    %226 = vmatprep.subr.mxu0 0.0
    %227 = vmatpush1.msra.mxu0 0.0
    %228 = vmatprep.subr.mxu0 0.0
    %229 = vmatpush1.msra.mxu0 0.0
    %230 = vmatprep.subr.mxu0 0.0
    %231 = vmatpush1.msra.mxu0 0.0
    %232 = vmatprep.subr.mxu0 0.0
    %233 = vmatpush1.msra.mxu0 0.0
    %234 = vmatprep.subr.mxu0 0.0
    %235 = vmatpush1.msra.mxu0 0.0
    %236 = vmatprep.subr.mxu0 0.0
    %237 = vmatpush1.msra.mxu0 0.0
    %238 = vmatprep.subr.mxu0 0.0
    %239 = vmatpush1.msra.mxu0 0.0
    %240 = vmatprep.mubr.f32.mxu0 0.0
    %241 = vmatmul.mubr.f32.gmra.mrb[0].mxu0 %v160
    %v242 = vpop.f32.mrb[0].mxu0
    %v243 = vadd.f32 0.0, %v242
    %v244 = vpop.f32.mrb[0].mxu0
    %245 = vmatprep.mubr.f32.mxu0 0.0
    %246 = vmatmul.mubr.f32.gmra.mrb[0].mxu0 %v161
    %v247 = vpop.f32.mrb[0].mxu0
    %v248 = vadd.f32 0.0, %v247
    %v249 = vpop.f32.mrb[0].mxu0
    %250 = vmatprep.mubr.f32.mxu0 0.0
    %251 = vmatmul.mubr.f32.gmra.mrb[0].mxu0 %v162
    %v252 = vpop.f32.mrb[0].mxu0
    %v253 = vadd.f32 0.0, %v252
    %v254 = vpop.f32.mrb[0].mxu0
    %255 = vmatprep.mubr.f32.mxu0 0.0
    %256 = vmatmul.mubr.f32.gmra.mrb[0].mxu0 %v163
    %v257 = vpop.f32.mrb[0].mxu0
    %v258 = vadd.f32 0.0, %v257
    %v259 = vpop.f32.mrb[0].mxu0
    %260 = vmatprep.mubr.f32.mxu0 0.0
    %261 = vmatmul.mubr.f32.gmra.mrb[0].mxu0 %v164
    %v262 = vpop.f32.mrb[0].mxu0
    %v263 = vadd.f32 0.0, %v262
    %v264 = vpop.f32.mrb[0].mxu0
    %265 = vmatprep.mubr.f32.mxu0 0.0
    %266 = vmatmul.mubr.f32.gmra.mrb[0].mxu0 %v165
    %v267 = vpop.f32.mrb[0].mxu0
    %v268 = vadd.f32 0.0, %v267
    %v269 = vpop.f32.mrb[0].mxu0
    %270 = vmatprep.mubr.f32.mxu0 0.0
    %271 = vmatmul.mubr.f32.gmra.mrb[0].mxu0 %v166
    %v272 = vpop.f32.mrb[0].mxu0
    %v273 = vadd.f32 0.0, %v272
    %v274 = vpop.f32.mrb[0].mxu0
    %275 = vmatprep.mubr.f32.mxu0 0.0
    %276 = vmatmul.mubr.f32.gmra.mrb[0].mxu0 %v167
    %v277 = vpop.f32.mrb[0].mxu0
    %v278 = vadd.f32 0.0, %v277
    %v279 = vpop.f32.mrb[0].mxu0
    %280 = vmatprep.mubr.f32.mxu0 0.0
    %281 = vmatmul.mubr.f32.gmra.mrb[0].mxu0 %v168
    %v282 = vpop.f32.mrb[0].mxu0
    %v283 = vadd.f32 0.0, %v282
    %v284 = vpop.f32.mrb[0].mxu0
    %285 = vmatprep.mubr.f32.mxu0 0.0
    %286 = vmatmul.mubr.f32.gmra.mrb[0].mxu0 %v169
    %v287 = vpop.f32.mrb[0].mxu0
    %v288 = vadd.f32 0.0, %v287
    %v289 = vpop.f32.mrb[0].mxu0
    %290 = vmatprep.mubr.f32.mxu0 0.0
    %291 = vmatmul.mubr.f32.gmra.mrb[0].mxu0 %v170
    %v292 = vpop.f32.mrb[0].mxu0
    %v293 = vadd.f32 0.0, %v292
    %v294 = vpop.f32.mrb[0].mxu0
    %295 = vmatprep.mubr.f32.mxu0 0.0
    %296 = vmatmul.mubr.f32.gmra.mrb[0].mxu0 %v171
    %v297 = vpop.f32.mrb[0].mxu0
    %v298 = vadd.f32 0.0, %v297
    %v299 = vpop.f32.mrb[0].mxu0
    %300 = vmatprep.mubr.f32.mxu0 0.0
    %301 = vmatmul.mubr.f32.gmra.mrb[0].mxu0 %v172
    %v302 = vpop.f32.mrb[0].mxu0
    %v303 = vadd.f32 0.0, %v302
    %v304 = vpop.f32.mrb[0].mxu0
    %305 = vmatprep.mubr.f32.mxu0 0.0
    %306 = vmatmul.mubr.f32.gmra.mrb[0].mxu0 %v173
    %v307 = vpop.f32.mrb[0].mxu0
    %v308 = vadd.f32 0.0, %v307
    %v309 = vpop.f32.mrb[0].mxu0
    %310 = vmatprep.mubr.f32.mxu0 0.0
    %311 = vmatmul.mubr.f32.gmra.mrb[0].mxu0 %v174
    %v312 = vpop.f32.mrb[0].mxu0
    %v313 = vadd.f32 0.0, %v312
    %v314 = vpop.f32.mrb[0].mxu0
    %315 = vmatprep.mubr.f32.mxu0 0.0
    %316 = vmatmul.mubr.f32.gmra.mrb[0].mxu0 %v175
    %v317 = vpop.f32.mrb[0].mxu0
    %v318 = vadd.f32 0.0, %v317
    %v319 = vpop.f32.mrb[0].mxu0
    %320 = vdwg.mxu0
    %321 = vst [vmem:[#allocation8] sm:$0xff] %v243
    %322 = vst [vmem:[#allocation8 + $0x8] sm:$0xff] %v248
    %323 = vst [vmem:[#allocation8 + $0x10] sm:$0xff] %v253
    %324 = vst [vmem:[#allocation8 + $0x18] sm:$0xff] %v258
    %325 = vst [vmem:[#allocation8 + $0x20] sm:$0xff] %v263
    %326 = vst [vmem:[#allocation8 + $0x28] sm:$0xff] %v268
    %327 = vst [vmem:[#allocation8 + $0x30] sm:$0xff] %v273
    %328 = vst [vmem:[#allocation8 + $0x38] sm:$0xff] %v278
    %329 = vst [vmem:[#allocation8 + $0x40] sm:$0xff] %v283
    %330 = vst [vmem:[#allocation8 + $0x48] sm:$0xff] %v288
    %331 = vst [vmem:[#allocation8 + $0x50] sm:$0xff] %v293
    %332 = vst [vmem:[#allocation8 + $0x58] sm:$0xff] %v298
    %333 = vst [vmem:[#allocation8 + $0x60] sm:$0xff] %v303
    %334 = vst [vmem:[#allocation8 + $0x68] sm:$0xff] %v308
    %335 = vst [vmem:[#allocation8 + $0x70] sm:$0xff] %v313
    %336 = vst [vmem:[#allocation8 + $0x78] sm:$0xff] %v318
    %v337 = vld [vmem:[#allocation5] sm:$0x3]
    %v338 = vld [vmem:[#allocation5 + $0x2] sm:$0x3]
    %v339 = vmul.f32 %v338, 0.5
    %v340 = vsub.f32 %v337, %v339
    %v341 = vld [vmem:[#allocation5 + $0x4] sm:$0x3]
    %v342 = vmul.f32 %v341, %v339
    %v343 = vadd.f32 %v340, %v342
    %v344 = vmax.f32 %v343, 0.0
    %v345 = vmin.f32 %v344, 1.0
    %v346 = vadd.f32 %v337, %v339
    %v347 = vld [vmem:[#allocation5 + $0x6] sm:$0x3]
    %v348 = vmul.f32 %v347, %v339
    %v349 = vadd.f32 %v346, %v348
    %v350 = vmax.f32 %v349, 0.0
    %v351 = vmin.f32 %v350, 1.0
    %v352 = vadd.f32 %v345, %v351
    %v353 = vmul.f32 %v352, 0.5
    %v354 = vmax.f32 %v353, 0.0
    %v355 = vmin.f32 %v354, 1.0
    %v356 = vmax.f32 %v355, 0.001
    %v357 = vsub.f32 1.0, %v355
    %v358 = vmax.f32 %v357, 0.001
    %v359 = vrcp.pop %v358
    %v360 = vmul.f32 %v356, %v359
    %v361 = vlog2.pop %v360
    %v362 = vmul.f32 %v361, 0.6931472
    %v364 = vlaneseq
    %v365 = vshrl.u32 %v364, 7
    %v366 = vsub.s32 0, %v365
    %v367 = vrot.slane %v58, %v366
    %v369 = vmul.f32 %v362, %v367
    %370 = vst [vmem:[#allocation9] sm:$0x3] %v369
    %v371 = vsub.f32 %v351, %v345
    %v372 = vmax.f32 %v371, 0.0
    %v373 = vmin.f32 %v372, 1.0
    %v374 = vmax.f32 %v373, 0.001
    %v375 = vsub.f32 1.0, %v373
    %v376 = vmax.f32 %v375, 0.001
    %v377 = vrcp.pop %v376
    %v378 = vmul.f32 %v374, %v377
    %v379 = vlog2.pop %v378
    %v380 = vmul.f32 %v379, 0.6931472
    %v381 = vmul.f32 %v380, %v367
    %382 = vst [vmem:[#allocation9 + $0x2] sm:$0x3] %v381
    // Predicated region
    $region26: #{tpu_custom_call.1} parent=1 // pred_check
      _
    $region27: #{tpu_custom_call.1} parent=1 // pred_check_branch
      %384 = sbr.rel (0) target = $region29
    $region28: #{tpu_custom_call.1} parent=1 // pred_region
      %s386 = ssub.s32 2048, 2048
      %387 = vsyncadd [#allocation4], %s386
      %s388 = sshll.u32 [#allocation8], 4
      %s389 = int_to_ptr.vmem [resolvable:$true] %s388
      %394 = dma.vmem_to_hbm [thread:$0]  %s389, 2048, %s3, [#allocation4], 128, 128, 8
    $region29: #{tpu_custom_call.1} parent=1 // pred_fallthru
      _
    // Predicated region
    $region30: #{tpu_custom_call.1} parent=1 // pred_check
      _
    $region31: #{tpu_custom_call.1} parent=1 // pred_check_branch
      %396 = sbr.rel (0) target = $region33
    $region32: #{tpu_custom_call.1} parent=1 // pred_region
      %s398 = ssub.s32 64, 64
      %399 = vsyncadd [#allocation10], %s398
      %s401 = sshll.u32 [#allocation9], 4
      %s402 = int_to_ptr.vmem [resolvable:$true] %s401
      %404 = dma.vmem_to_hbm [thread:$0]  %s402, 64, %s4, [#allocation10]
    $region33: #{tpu_custom_call.1} parent=1 // pred_fallthru
      _
    // Predicated region
    $region34: #{tpu_custom_call.1} parent=1 // pred_check
      _
    $region35: #{tpu_custom_call.1} parent=1 // pred_check_branch
      %406 = sbr.rel (0) target = $region37
    $region36: #{tpu_custom_call.1} parent=1 // pred_region
      %407 = dma.done [#allocation4], 2048
    $region37: #{tpu_custom_call.1} parent=1 // pred_fallthru
      _
    // Predicated region
    $region38: #{tpu_custom_call.1} parent=1 // pred_check
      _
    $region39: #{tpu_custom_call.1} parent=1 // pred_check_branch
      %409 = sbr.rel (0) target = $region41
    $region40: #{tpu_custom_call.1} parent=1 // pred_region
      %410 = dma.done [#allocation10], 64
    $region41: #{tpu_custom_call.1} parent=1 // pred_fallthru
      _
    %411 = vsyncpa [#allocation3], 1
    %412 = vsyncpa [#allocation6], 1
    %413 = vsyncpa [#allocation4], 1
    %414 = vsyncpa [#allocation10], 1

</llo_original>
